<compile_context>
chip_gen: v5e
topology: v5e:2x2
jax: 0.10.0
libtpu: 0.0.40
codegen_flags: <defaults>
</compile_context>

<pallas_src>
import jax
import jax.numpy as jnp
from jax.experimental import pallas as pl
from jax.experimental.pallas import tpu as pltpu

N_LAYER = 2
N_NEURONS = 32
TANH_GAIN = 5.0 / 3.0
LN_EPS = 1e-5
_LANE = 128
_SUBLANE = 8


def _round_up(x, m):
    return ((x + m - 1) // m) * m


def _layer_norm_fm(h, gamma, beta, eps=LN_EPS):
    """LayerNorm over the feature axis (axis 0) of a feature-major [F, B] tile."""
    mu = jnp.mean(h, axis=0, keepdims=True)
    d = h - mu
    var = jnp.mean(d * d, axis=0, keepdims=True)
    return d * jax.lax.rsqrt(var + eps) * gamma + beta


def actor_kernel(x_ref, w1_ref, b1_ref, g1_ref, be1_ref,
                 w2_ref, b2_ref, g2_ref, be2_ref,
                 wl_ref, bl_ref, out_ref):
    # Feature-major: x is [input_dim, TB]; weights are torch-style [out, in],
    # so each layer computes W @ X.
    x = x_ref[...]                                                      # [in, TB]

    # fc1: Linear -> Tanh -> LayerNorm
    h = jnp.tanh(
        jnp.dot(w1_ref[...], x, preferred_element_type=jnp.float32) + b1_ref[...]
    )                                                                   # [N, TB]
    h = _layer_norm_fm(h, g1_ref[...], be1_ref[...])

    # hidden layers (N_LAYER is static -> unrolled); index stacked params per
    # iteration instead of materializing the full [L, N, N] stack.
    for i in range(N_LAYER):
        h = jnp.tanh(
            jnp.dot(w2_ref[i], h, preferred_element_type=jnp.float32) + b2_ref[i]
        )
        h = _layer_norm_fm(h, g2_ref[i], be2_ref[i])

    # last: Linear (no activation); out_ref is [out_pad, TB] -> lane-dense store.
    out_ref[...] = (
        jnp.dot(wl_ref[...], h, preferred_element_type=jnp.float32) + bl_ref[...]
    )


def actor_forward(x, params, output_dim, *, batch_tile=2048):
    """x: [B, input_dim] -> logits [B, output_dim]."""
    (w1, b1, g1, be1, w2, b2, g2, be2, wl, bl) = params
    B, in_dim = x.shape
    out_pad = wl.shape[0]

    tb = min(batch_tile, _round_up(B, _LANE))
    b_pad = _round_up(B, tb)
    n_tiles = b_pad // tb

    # Feature-major input [in_dim, B_pad]; padded batch columns are zeros and
    # cannot contaminate real columns (LayerNorm reduces over features only).
    x_t = jnp.zeros((in_dim, b_pad), jnp.float32).at[:, :B].set(x.T)

    def resident2(shape):
        return pl.BlockSpec(shape, lambda i: (0, 0))

    def resident3(shape):
        return pl.BlockSpec(shape, lambda i: (0, 0, 0))

    n_params = sum(int(p.size) for p in params)
    cost = pl.CostEstimate(
        flops=2 * b_pad * (in_dim * N_NEURONS
                           + N_LAYER * N_NEURONS * N_NEURONS
                           + N_NEURONS * out_pad),
        transcendentals=b_pad * (N_NEURONS * (1 + N_LAYER) + (1 + N_LAYER)),
        bytes_accessed=4 * (in_dim * b_pad + out_pad * b_pad + n_params),
    )

    out_t = pl.pallas_call(
        actor_kernel,
        out_shape=jax.ShapeDtypeStruct((out_pad, b_pad), jnp.float32),
        grid=(n_tiles,),
        in_specs=[
            pl.BlockSpec((in_dim, tb), lambda i: (0, i)),      # x tile (pipelined)
            resident2((N_NEURONS, in_dim)),                    # w1
            resident2((N_NEURONS, 1)),                         # b1
            resident2((N_NEURONS, 1)),                         # gamma1
            resident2((N_NEURONS, 1)),                         # beta1
            resident3((N_LAYER, N_NEURONS, N_NEURONS)),        # w2 stack
            resident3((N_LAYER, N_NEURONS, 1)),                # b2 stack
            resident3((N_LAYER, N_NEURONS, 1)),                # gamma2 stack
            resident3((N_LAYER, N_NEURONS, 1)),                # beta2 stack
            resident2((out_pad, N_NEURONS)),                   # w_last (padded)
            resident2((out_pad, 1)),                           # b_last (padded)
        ],
        out_specs=pl.BlockSpec((out_pad, tb), lambda i: (0, i)),
        compiler_params=pltpu.CompilerParams(
            dimension_semantics=("parallel",),                 # megacore on v7x
        ),
        cost_estimate=cost,
    )(x_t, w1, b1, g1, be1, w2, b2, g2, be2, wl, bl)

    # Back to batch-major [B, output_dim]; drop padded rows / columns.
    return out_t[:output_dim, :B].T


def make_params(key, input_dim, output_dim):
    """Deterministic init matching the torch module's shapes, feature-major.

    Linear weights stored torch-style [out_features, in_features]:
      base MLP: orthogonal init with tanh gain; biases 0; LayerNorm gamma=1, beta=0.
    'last' layer weight is zero-padded to a sublane-aligned number of output rows.
    """
    orth_tanh = jax.nn.initializers.orthogonal(scale=TANH_GAIN)
    orth_one = jax.nn.initializers.orthogonal(scale=1.0)
    k1, k2, k3 = jax.random.split(key, 3)

    out_pad = _round_up(output_dim, _SUBLANE)

    # fc1
    w1 = orth_tanh(k1, (N_NEURONS, input_dim), jnp.float32)       # [N, in]
    b1 = jnp.zeros((N_NEURONS, 1), jnp.float32)
    g1 = jnp.ones((N_NEURONS, 1), jnp.float32)
    be1 = jnp.zeros((N_NEURONS, 1), jnp.float32)

    # fc2 (stacked)
    ks = jax.random.split(k2, N_LAYER)
    w2 = jnp.stack(
        [orth_tanh(ks[i], (N_NEURONS, N_NEURONS), jnp.float32) for i in range(N_LAYER)]
    )                                                             # [L, N, N]
    b2 = jnp.zeros((N_LAYER, N_NEURONS, 1), jnp.float32)
    g2 = jnp.ones((N_LAYER, N_NEURONS, 1), jnp.float32)
    be2 = jnp.zeros((N_LAYER, N_NEURONS, 1), jnp.float32)

    # last (padded rows are zero -> harmless, sliced off in the wrapper)
    # TODO(synk): torch's default Linear init for 'last' is Kaiming-uniform; an
    # orthogonal(gain=1) init is used here for determinism (forward math unchanged).
    wl_core = orth_one(k3, (output_dim, N_NEURONS), jnp.float32)  # [out, N]
    wl = jnp.zeros((out_pad, N_NEURONS), jnp.float32).at[:output_dim].set(wl_core)
    bl = jnp.zeros((out_pad, 1), jnp.float32)

    return (w1, b1, g1, be1, w2, b2, g2, be2, wl, bl)


def actor_reference(x, params, output_dim):
    """Pure-JAX reference (standard batch-major math) for correctness checking."""
    (w1, b1, g1, be1, w2, b2, g2, be2, wl, bl) = params

    def ln(h, g, be):
        mu = jnp.mean(h, axis=-1, keepdims=True)
        var = jnp.mean((h - mu) ** 2, axis=-1, keepdims=True)
        return (h - mu) * jax.lax.rsqrt(var + LN_EPS) * g + be

    h = jnp.tanh(x @ w1.T + b1[:, 0])
    h = ln(h, g1[:, 0], be1[:, 0])
    for i in range(N_LAYER):
        h = jnp.tanh(h @ w2[i].T + b2[i, :, 0])
        h = ln(h, g2[i, :, 0], be2[i, :, 0])
    out = h @ wl.T + bl[:, 0]
    return out[:, :output_dim]


if __name__ == "__main__":
    key = jax.random.PRNGKey(0)
    kx, kp = jax.random.split(key)

    B, input_dim, output_dim = 8, 16, 6
    x = jax.random.normal(kx, (B, input_dim), dtype=jnp.float32)
    params = make_params(kp, input_dim, output_dim)

    logits = actor_forward(x, params, output_dim)
    logits = jax.block_until_ready(logits)

    ref = actor_reference(x, params, output_dim)
    assert logits.shape == (B, output_dim)
    assert jnp.allclose(logits, ref, atol=1e-4, rtol=1e-4), "mismatch vs reference"

    # TODO(synk): get_action's Categorical sample/log_prob/entropy are
    # distribution utilities outside the kernel hot path; only the forward
    # pass (logits) is implemented here.
    print("KERNEL_OK")
</pallas_src>

<mosaic_0001>
module attributes {stable_mosaic.version = 11 : i64} {
  func.func @actor_kernel(%arg0: i32, %arg1: memref<16x128xf32, #tpu.memory_space<vmem>>, %arg2: memref<32x16xf32, #tpu.memory_space<vmem>>, %arg3: memref<32x1xf32, #tpu.memory_space<vmem>>, %arg4: memref<32x1xf32, #tpu.memory_space<vmem>>, %arg5: memref<32x1xf32, #tpu.memory_space<vmem>>, %arg6: memref<2x32x32xf32, #tpu.memory_space<vmem>>, %arg7: memref<2x32x1xf32, #tpu.memory_space<vmem>>, %arg8: memref<2x32x1xf32, #tpu.memory_space<vmem>>, %arg9: memref<2x32x1xf32, #tpu.memory_space<vmem>>, %arg10: memref<8x32xf32, #tpu.memory_space<vmem>>, %arg11: memref<8x1xf32, #tpu.memory_space<vmem>>, %arg12: memref<8x128xf32, #tpu.memory_space<vmem>>) attributes {dimension_semantics = [#tpu.dimension_semantics<parallel>], iteration_bounds = array<i64: 1>, scalar_prefetch = 0 : i64, scratch_operands = 0 : i64, tpu.core_type = #tpu.core_type<tc>, window_params = [{transform_indices = @transform_0, window_bounds = array<i64: 16, 128>}, {pipeline_mode = #tpu.pipeline_mode<synchronous>, transform_indices = @transform_1, window_bounds = array<i64: 32, 16>}, {pipeline_mode = #tpu.pipeline_mode<synchronous>, transform_indices = @transform_2, window_bounds = array<i64: 32, 1>}, {pipeline_mode = #tpu.pipeline_mode<synchronous>, transform_indices = @transform_3, window_bounds = array<i64: 32, 1>}, {pipeline_mode = #tpu.pipeline_mode<synchronous>, transform_indices = @transform_4, window_bounds = array<i64: 32, 1>}, {pipeline_mode = #tpu.pipeline_mode<synchronous>, transform_indices = @transform_5, window_bounds = array<i64: 2, 32, 32>}, {pipeline_mode = #tpu.pipeline_mode<synchronous>, transform_indices = @transform_6, window_bounds = array<i64: 2, 32, 1>}, {pipeline_mode = #tpu.pipeline_mode<synchronous>, transform_indices = @transform_7, window_bounds = array<i64: 2, 32, 1>}, {pipeline_mode = #tpu.pipeline_mode<synchronous>, transform_indices = @transform_8, window_bounds = array<i64: 2, 32, 1>}, {pipeline_mode = #tpu.pipeline_mode<synchronous>, transform_indices = @transform_9, window_bounds = array<i64: 8, 32>}, {pipeline_mode = #tpu.pipeline_mode<synchronous>, transform_indices = @transform_10, window_bounds = array<i64: 8, 1>}, {transform_indices = @transform_11, window_bounds = array<i64: 8, 128>}]} {
    %c0 = arith.constant 0 : index
    %c0_0 = arith.constant 0 : index
    %0 = vector.load %arg1[%c0, %c0_0] : memref<16x128xf32, #tpu.memory_space<vmem>>, vector<16x128xf32>
    %c0_1 = arith.constant 0 : index
    %c0_2 = arith.constant 0 : index
    %1 = vector.load %arg2[%c0_1, %c0_2] : memref<32x16xf32, #tpu.memory_space<vmem>>, vector<32x16xf32>
    %cst = arith.constant dense<0.000000e+00> : vector<32x128xf32>
    %2 = tpu.matmul %1, %0, %cst {dimension_numbers = #tpu.dot_dimension_numbers<[1], [0], [0], [1], [0, 0, 1, 1], [], []>} : vector<32x16xf32>, vector<16x128xf32>, vector<32x128xf32> -> vector<32x128xf32>
    %c0_3 = arith.constant 0 : index
    %c0_4 = arith.constant 0 : index
    %3 = vector.load %arg3[%c0_3, %c0_4] : memref<32x1xf32, #tpu.memory_space<vmem>>, vector<32x1xf32>
    %4 = vector.broadcast %3 : vector<32x1xf32> to vector<32x128xf32>
    %5 = arith.addf %2, %4 : vector<32x128xf32>
    %6 = math.tanh %5 : vector<32x128xf32>
    %c0_5 = arith.constant 0 : index
    %c0_6 = arith.constant 0 : index
    %7 = vector.load %arg4[%c0_5, %c0_6] : memref<32x1xf32, #tpu.memory_space<vmem>>, vector<32x1xf32>
    %c0_7 = arith.constant 0 : index
    %c0_8 = arith.constant 0 : index
    %8 = vector.load %arg5[%c0_7, %c0_8] : memref<32x1xf32, #tpu.memory_space<vmem>>, vector<32x1xf32>
    %cst_9 = arith.constant dense<0.000000e+00> : vector<128xf32>
    %9 = vector.multi_reduction <add>, %6, %cst_9 [0] : vector<32x128xf32> to vector<128xf32>
    %10 = vector.shape_cast %9 : vector<128xf32> to vector<1x128xf32>
    %cst_10 = arith.constant 3.200000e+01 : f32
    %11 = vector.broadcast %cst_10 : f32 to vector<1x128xf32>
    %12 = arith.divf %10, %11 : vector<1x128xf32>
    %13 = vector.broadcast %12 : vector<1x128xf32> to vector<32x128xf32>
    %14 = arith.subf %6, %13 : vector<32x128xf32>
    %15 = arith.mulf %14, %14 : vector<32x128xf32>
    %cst_11 = arith.constant dense<0.000000e+00> : vector<128xf32>
    %16 = vector.multi_reduction <add>, %15, %cst_11 [0] : vector<32x128xf32> to vector<128xf32>
    %17 = vector.shape_cast %16 : vector<128xf32> to vector<1x128xf32>
    %cst_12 = arith.constant 3.200000e+01 : f32
    %18 = vector.broadcast %cst_12 : f32 to vector<1x128xf32>
    %19 = arith.divf %17, %18 : vector<1x128xf32>
    %cst_13 = arith.constant 9.99999974E-6 : f32
    %20 = vector.broadcast %cst_13 : f32 to vector<1x128xf32>
    %21 = arith.addf %19, %20 : vector<1x128xf32>
    %22 = math.rsqrt %21 : vector<1x128xf32>
    %23 = vector.broadcast %22 : vector<1x128xf32> to vector<32x128xf32>
    %24 = arith.mulf %14, %23 : vector<32x128xf32>
    %25 = vector.broadcast %7 : vector<32x1xf32> to vector<32x128xf32>
    %26 = arith.mulf %24, %25 : vector<32x128xf32>
    %27 = vector.broadcast %8 : vector<32x1xf32> to vector<32x128xf32>
    %28 = arith.addf %26, %27 : vector<32x128xf32>
    %c0_14 = arith.constant 0 : index
    %c0_15 = arith.constant 0 : index
    %c0_16 = arith.constant 0 : index
    %29 = vector.load %arg6[%c0_14, %c0_15, %c0_16] : memref<2x32x32xf32, #tpu.memory_space<vmem>>, vector<1x32x32xf32>
    %30 = vector.shape_cast %29 : vector<1x32x32xf32> to vector<32x32xf32>
    %cst_17 = arith.constant dense<0.000000e+00> : vector<32x128xf32>
    %31 = tpu.matmul %30, %28, %cst_17 {dimension_numbers = #tpu.dot_dimension_numbers<[1], [0], [0], [1], [0, 0, 1, 1], [], []>} : vector<32x32xf32>, vector<32x128xf32>, vector<32x128xf32> -> vector<32x128xf32>
    %c0_18 = arith.constant 0 : index
    %c0_19 = arith.constant 0 : index
    %c0_20 = arith.constant 0 : index
    %32 = vector.load %arg7[%c0_18, %c0_19, %c0_20] : memref<2x32x1xf32, #tpu.memory_space<vmem>>, vector<1x32x1xf32>
    %33 = vector.shape_cast %32 : vector<1x32x1xf32> to vector<32x1xf32>
    %34 = vector.broadcast %33 : vector<32x1xf32> to vector<32x128xf32>
    %35 = arith.addf %31, %34 : vector<32x128xf32>
    %36 = math.tanh %35 : vector<32x128xf32>
    %c0_21 = arith.constant 0 : index
    %c0_22 = arith.constant 0 : index
    %c0_23 = arith.constant 0 : index
    %37 = vector.load %arg8[%c0_21, %c0_22, %c0_23] : memref<2x32x1xf32, #tpu.memory_space<vmem>>, vector<1x32x1xf32>
    %38 = vector.shape_cast %37 : vector<1x32x1xf32> to vector<32x1xf32>
    %c0_24 = arith.constant 0 : index
    %c0_25 = arith.constant 0 : index
    %c0_26 = arith.constant 0 : index
    %39 = vector.load %arg9[%c0_24, %c0_25, %c0_26] : memref<2x32x1xf32, #tpu.memory_space<vmem>>, vector<1x32x1xf32>
    %40 = vector.shape_cast %39 : vector<1x32x1xf32> to vector<32x1xf32>
    %cst_27 = arith.constant dense<0.000000e+00> : vector<128xf32>
    %41 = vector.multi_reduction <add>, %36, %cst_27 [0] : vector<32x128xf32> to vector<128xf32>
    %42 = vector.shape_cast %41 : vector<128xf32> to vector<1x128xf32>
    %cst_28 = arith.constant 3.200000e+01 : f32
    %43 = vector.broadcast %cst_28 : f32 to vector<1x128xf32>
    %44 = arith.divf %42, %43 : vector<1x128xf32>
    %45 = vector.broadcast %44 : vector<1x128xf32> to vector<32x128xf32>
    %46 = arith.subf %36, %45 : vector<32x128xf32>
    %47 = arith.mulf %46, %46 : vector<32x128xf32>
    %cst_29 = arith.constant dense<0.000000e+00> : vector<128xf32>
    %48 = vector.multi_reduction <add>, %47, %cst_29 [0] : vector<32x128xf32> to vector<128xf32>
    %49 = vector.shape_cast %48 : vector<128xf32> to vector<1x128xf32>
    %cst_30 = arith.constant 3.200000e+01 : f32
    %50 = vector.broadcast %cst_30 : f32 to vector<1x128xf32>
    %51 = arith.divf %49, %50 : vector<1x128xf32>
    %cst_31 = arith.constant 9.99999974E-6 : f32
    %52 = vector.broadcast %cst_31 : f32 to vector<1x128xf32>
    %53 = arith.addf %51, %52 : vector<1x128xf32>
    %54 = math.rsqrt %53 : vector<1x128xf32>
    %55 = vector.broadcast %54 : vector<1x128xf32> to vector<32x128xf32>
    %56 = arith.mulf %46, %55 : vector<32x128xf32>
    %57 = vector.broadcast %38 : vector<32x1xf32> to vector<32x128xf32>
    %58 = arith.mulf %56, %57 : vector<32x128xf32>
    %59 = vector.broadcast %40 : vector<32x1xf32> to vector<32x128xf32>
    %60 = arith.addf %58, %59 : vector<32x128xf32>
    %c1 = arith.constant 1 : index
    %c0_32 = arith.constant 0 : index
    %c0_33 = arith.constant 0 : index
    %61 = vector.load %arg6[%c1, %c0_32, %c0_33] : memref<2x32x32xf32, #tpu.memory_space<vmem>>, vector<1x32x32xf32>
    %62 = vector.shape_cast %61 : vector<1x32x32xf32> to vector<32x32xf32>
    %cst_34 = arith.constant dense<0.000000e+00> : vector<32x128xf32>
    %63 = tpu.matmul %62, %60, %cst_34 {dimension_numbers = #tpu.dot_dimension_numbers<[1], [0], [0], [1], [0, 0, 1, 1], [], []>} : vector<32x32xf32>, vector<32x128xf32>, vector<32x128xf32> -> vector<32x128xf32>
    %c1_35 = arith.constant 1 : index
    %c0_36 = arith.constant 0 : index
    %c0_37 = arith.constant 0 : index
    %64 = vector.load %arg7[%c1_35, %c0_36, %c0_37] : memref<2x32x1xf32, #tpu.memory_space<vmem>>, vector<1x32x1xf32>
    %65 = vector.shape_cast %64 : vector<1x32x1xf32> to vector<32x1xf32>
    %66 = vector.broadcast %65 : vector<32x1xf32> to vector<32x128xf32>
    %67 = arith.addf %63, %66 : vector<32x128xf32>
    %68 = math.tanh %67 : vector<32x128xf32>
    %c1_38 = arith.constant 1 : index
    %c0_39 = arith.constant 0 : index
    %c0_40 = arith.constant 0 : index
    %69 = vector.load %arg8[%c1_38, %c0_39, %c0_40] : memref<2x32x1xf32, #tpu.memory_space<vmem>>, vector<1x32x1xf32>
    %70 = vector.shape_cast %69 : vector<1x32x1xf32> to vector<32x1xf32>
    %c1_41 = arith.constant 1 : index
    %c0_42 = arith.constant 0 : index
    %c0_43 = arith.constant 0 : index
    %71 = vector.load %arg9[%c1_41, %c0_42, %c0_43] : memref<2x32x1xf32, #tpu.memory_space<vmem>>, vector<1x32x1xf32>
    %72 = vector.shape_cast %71 : vector<1x32x1xf32> to vector<32x1xf32>
    %cst_44 = arith.constant dense<0.000000e+00> : vector<128xf32>
    %73 = vector.multi_reduction <add>, %68, %cst_44 [0] : vector<32x128xf32> to vector<128xf32>
    %74 = vector.shape_cast %73 : vector<128xf32> to vector<1x128xf32>
    %cst_45 = arith.constant 3.200000e+01 : f32
    %75 = vector.broadcast %cst_45 : f32 to vector<1x128xf32>
    %76 = arith.divf %74, %75 : vector<1x128xf32>
    %77 = vector.broadcast %76 : vector<1x128xf32> to vector<32x128xf32>
    %78 = arith.subf %68, %77 : vector<32x128xf32>
    %79 = arith.mulf %78, %78 : vector<32x128xf32>
    %cst_46 = arith.constant dense<0.000000e+00> : vector<128xf32>
    %80 = vector.multi_reduction <add>, %79, %cst_46 [0] : vector<32x128xf32> to vector<128xf32>
    %81 = vector.shape_cast %80 : vector<128xf32> to vector<1x128xf32>
    %cst_47 = arith.constant 3.200000e+01 : f32
    %82 = vector.broadcast %cst_47 : f32 to vector<1x128xf32>
    %83 = arith.divf %81, %82 : vector<1x128xf32>
    %cst_48 = arith.constant 9.99999974E-6 : f32
    %84 = vector.broadcast %cst_48 : f32 to vector<1x128xf32>
    %85 = arith.addf %83, %84 : vector<1x128xf32>
    %86 = math.rsqrt %85 : vector<1x128xf32>
    %87 = vector.broadcast %86 : vector<1x128xf32> to vector<32x128xf32>
    %88 = arith.mulf %78, %87 : vector<32x128xf32>
    %89 = vector.broadcast %70 : vector<32x1xf32> to vector<32x128xf32>
    %90 = arith.mulf %88, %89 : vector<32x128xf32>
    %91 = vector.broadcast %72 : vector<32x1xf32> to vector<32x128xf32>
    %92 = arith.addf %90, %91 : vector<32x128xf32>
    %c0_49 = arith.constant 0 : index
    %c0_50 = arith.constant 0 : index
    %93 = vector.load %arg10[%c0_49, %c0_50] : memref<8x32xf32, #tpu.memory_space<vmem>>, vector<8x32xf32>
    %cst_51 = arith.constant dense<0.000000e+00> : vector<8x128xf32>
    %94 = tpu.matmul %93, %92, %cst_51 {dimension_numbers = #tpu.dot_dimension_numbers<[1], [0], [0], [1], [0, 0, 1, 1], [], []>} : vector<8x32xf32>, vector<32x128xf32>, vector<8x128xf32> -> vector<8x128xf32>
    %c0_52 = arith.constant 0 : index
    %c0_53 = arith.constant 0 : index
    %95 = vector.load %arg11[%c0_52, %c0_53] : memref<8x1xf32, #tpu.memory_space<vmem>>, vector<8x1xf32>
    %96 = vector.broadcast %95 : vector<8x1xf32> to vector<8x128xf32>
    %97 = arith.addf %94, %96 : vector<8x128xf32>
    %c0_54 = arith.constant 0 : index
    %c0_55 = arith.constant 0 : index
    %98 = vector.load %arg12[%c0_54, %c0_55] : memref<8x128xf32, #tpu.memory_space<vmem>>, vector<8x128xf32>
    tpu.vector_store %arg12[%c0_54, %c0_55], %97 {strides = array<i32>} : memref<8x128xf32, #tpu.memory_space<vmem>>, vector<8x128xf32>,
    return
  }
  func.func @transform_0(%arg0: i32) -> (i32, i32) {
    %c0_i32 = arith.constant 0 : i32
    %c0_i32_0 = arith.constant 0 : i32
    return %c0_i32, %arg0 : i32, i32
  }
  func.func @transform_1(%arg0: i32) -> (i32, i32) {
    %c0_i32 = arith.constant 0 : i32
    %c0_i32_0 = arith.constant 0 : i32
    %c0_i32_1 = arith.constant 0 : i32
    return %c0_i32, %c0_i32_0 : i32, i32
  }
  func.func @transform_2(%arg0: i32) -> (i32, i32) {
    %c0_i32 = arith.constant 0 : i32
    %c0_i32_0 = arith.constant 0 : i32
    %c0_i32_1 = arith.constant 0 : i32
    return %c0_i32, %c0_i32_0 : i32, i32
  }
  func.func @transform_3(%arg0: i32) -> (i32, i32) {
    %c0_i32 = arith.constant 0 : i32
    %c0_i32_0 = arith.constant 0 : i32
    %c0_i32_1 = arith.constant 0 : i32
    return %c0_i32, %c0_i32_0 : i32, i32
  }
  func.func @transform_4(%arg0: i32) -> (i32, i32) {
    %c0_i32 = arith.constant 0 : i32
    %c0_i32_0 = arith.constant 0 : i32
    %c0_i32_1 = arith.constant 0 : i32
    return %c0_i32, %c0_i32_0 : i32, i32
  }
  func.func @transform_5(%arg0: i32) -> (i32, i32, i32) {
    %c0_i32 = arith.constant 0 : i32
    %c0_i32_0 = arith.constant 0 : i32
    %c0_i32_1 = arith.constant 0 : i32
    %c0_i32_2 = arith.constant 0 : i32
    return %c0_i32, %c0_i32_0, %c0_i32_1 : i32, i32, i32
  }
  func.func @transform_6(%arg0: i32) -> (i32, i32, i32) {
    %c0_i32 = arith.constant 0 : i32
    %c0_i32_0 = arith.constant 0 : i32
    %c0_i32_1 = arith.constant 0 : i32
    %c0_i32_2 = arith.constant 0 : i32
    return %c0_i32, %c0_i32_0, %c0_i32_1 : i32, i32, i32
  }
  func.func @transform_7(%arg0: i32) -> (i32, i32, i32) {
    %c0_i32 = arith.constant 0 : i32
    %c0_i32_0 = arith.constant 0 : i32
    %c0_i32_1 = arith.constant 0 : i32
    %c0_i32_2 = arith.constant 0 : i32
    return %c0_i32, %c0_i32_0, %c0_i32_1 : i32, i32, i32
  }
  func.func @transform_8(%arg0: i32) -> (i32, i32, i32) {
    %c0_i32 = arith.constant 0 : i32
    %c0_i32_0 = arith.constant 0 : i32
    %c0_i32_1 = arith.constant 0 : i32
    %c0_i32_2 = arith.constant 0 : i32
    return %c0_i32, %c0_i32_0, %c0_i32_1 : i32, i32, i32
  }
  func.func @transform_9(%arg0: i32) -> (i32, i32) {
    %c0_i32 = arith.constant 0 : i32
    %c0_i32_0 = arith.constant 0 : i32
    %c0_i32_1 = arith.constant 0 : i32
    return %c0_i32, %c0_i32_0 : i32, i32
  }
  func.func @transform_10(%arg0: i32) -> (i32, i32) {
    %c0_i32 = arith.constant 0 : i32
    %c0_i32_0 = arith.constant 0 : i32
    %c0_i32_1 = arith.constant 0 : i32
    return %c0_i32, %c0_i32_0 : i32, i32
  }
  func.func @transform_11(%arg0: i32) -> (i32, i32) {
    %c0_i32 = arith.constant 0 : i32
    %c0_i32_0 = arith.constant 0 : i32
    return %c0_i32, %arg0 : i32, i32
  }
}

</mosaic_0001>

<llo_original>
// kernel: tpu_custom_call.1
$region0: #{tpu_custom_call.1}
  #allocation0 [shape = 'u32[]', space=smem, size = 0x4, offset = 0x4, fixed_abs, tag = 'smem constant byte address 0x4 - core index']
  #allocation1 [shape = 'u32[72,128]{1,0:T(1,128)}', space=vmem, size = 0x9000, scoped, tag = 'internal scratch']
  %s0 = inlined_call_operand.vmem [shape: f32[16,128], index: 0, kind: input, shape index: {}]
  %s1 = inlined_call_operand.vmem [shape: f32[32,16], index: 1, kind: input, shape index: {}]
  %s2 = inlined_call_operand.vmem [shape: f32[32,1], index: 2, kind: input, shape index: {}]
  %s3 = inlined_call_operand.vmem [shape: f32[32,1], index: 3, kind: input, shape index: {}]
  %s4 = inlined_call_operand.vmem [shape: f32[32,1], index: 4, kind: input, shape index: {}]
  %s5 = inlined_call_operand.vmem [shape: f32[2,32,32], index: 5, kind: input, shape index: {}]
  %s6 = inlined_call_operand.vmem [shape: f32[2,32,1], index: 6, kind: input, shape index: {}]
  %s7 = inlined_call_operand.vmem [shape: f32[2,32,1], index: 7, kind: input, shape index: {}]
  %s8 = inlined_call_operand.vmem [shape: f32[2,32,1], index: 8, kind: input, shape index: {}]
  %s9 = inlined_call_operand.vmem [shape: f32[8,32], index: 9, kind: input, shape index: {}]
  %s10 = inlined_call_operand.vmem [shape: f32[8,1], index: 10, kind: input, shape index: {}]
  %s11 = inlined_call_operand.hbm [shape: f32[8,128], index: 11, kind: output, shape index: {}]
  %s12 = sld [smem:[#allocation0]]
  $region54: #{tpu_custom_call.1} parent=0
    _
  %s14 = ssub.s32 1, %s12
  %s15 = scalar_select 0, %s14, %s12
  $region1: #{tpu_custom_call.1} parent=0
    #allocation2 [shape = 'u8[4096]{0}', space=vmem, size = 0x1000, scoped, tag = 'output window, operand 0, single buffered']
    #allocation3 [shape = 's32[1]{0}', space=sflag, size = 0x4, scoped, tag = 'scoped memory for tpu_custom_call.1']
    %16 = vsyncpa [#allocation3], 0
    // Predicated region
    $region2: #{tpu_custom_call.1} parent=1 // pred_check
      _
    $region3: #{tpu_custom_call.1} parent=1 // pred_check_branch
      %18 = sbr.rel (0) target = $region5
    $region4: #{tpu_custom_call.1} parent=1 // pred_region
      _
    $region5: #{tpu_custom_call.1} parent=1 // pred_fallthru
      _
    // Predicated region
    $region6: #{tpu_custom_call.1} parent=1 // pred_check
      _
    $region7: #{tpu_custom_call.1} parent=1 // pred_check_branch
      %20 = sbr.rel (0) target = $region9
    $region8: #{tpu_custom_call.1} parent=1 // pred_region
      _
    $region9: #{tpu_custom_call.1} parent=1 // pred_fallthru
      _
    // Predicated region
    $region10: #{tpu_custom_call.1} parent=1 // pred_check
      _
    $region11: #{tpu_custom_call.1} parent=1 // pred_check_branch
      %22 = sbr.rel (0) target = $region13
    $region12: #{tpu_custom_call.1} parent=1 // pred_region
      _
    $region13: #{tpu_custom_call.1} parent=1 // pred_fallthru
      _
    // Predicated region
    $region14: #{tpu_custom_call.1} parent=1 // pred_check
      _
    $region15: #{tpu_custom_call.1} parent=1 // pred_check_branch
      %24 = sbr.rel (0) target = $region17
    $region16: #{tpu_custom_call.1} parent=1 // pred_region
      _
    $region17: #{tpu_custom_call.1} parent=1 // pred_fallthru
      _
    // Predicated region
    $region18: #{tpu_custom_call.1} parent=1 // pred_check
      _
    $region19: #{tpu_custom_call.1} parent=1 // pred_check_branch
      %26 = sbr.rel (0) target = $region21
    $region20: #{tpu_custom_call.1} parent=1 // pred_region
      _
    $region21: #{tpu_custom_call.1} parent=1 // pred_fallthru
      _
    // Predicated region
    $region22: #{tpu_custom_call.1} parent=1 // pred_check
      _
    $region23: #{tpu_custom_call.1} parent=1 // pred_check_branch
      %28 = sbr.rel (0) target = $region25
    $region24: #{tpu_custom_call.1} parent=1 // pred_region
      _
    $region25: #{tpu_custom_call.1} parent=1 // pred_fallthru
      _
    // Predicated region
    $region26: #{tpu_custom_call.1} parent=1 // pred_check
      _
    $region27: #{tpu_custom_call.1} parent=1 // pred_check_branch
      %30 = sbr.rel (0) target = $region29
    $region28: #{tpu_custom_call.1} parent=1 // pred_region
      _
    $region29: #{tpu_custom_call.1} parent=1 // pred_fallthru
      _
    // Predicated region
    $region30: #{tpu_custom_call.1} parent=1 // pred_check
      _
    $region31: #{tpu_custom_call.1} parent=1 // pred_check_branch
      %32 = sbr.rel (0) target = $region33
    $region32: #{tpu_custom_call.1} parent=1 // pred_region
      _
    $region33: #{tpu_custom_call.1} parent=1 // pred_fallthru
      _
    // Predicated region
    $region34: #{tpu_custom_call.1} parent=1 // pred_check
      _
    $region35: #{tpu_custom_call.1} parent=1 // pred_check_branch
      %34 = sbr.rel (0) target = $region37
    $region36: #{tpu_custom_call.1} parent=1 // pred_region
      _
    $region37: #{tpu_custom_call.1} parent=1 // pred_fallthru
      _
    // Predicated region
    $region38: #{tpu_custom_call.1} parent=1 // pred_check
      _
    $region39: #{tpu_custom_call.1} parent=1 // pred_check_branch
      %36 = sbr.rel (0) target = $region41
    $region40: #{tpu_custom_call.1} parent=1 // pred_region
      _
    $region41: #{tpu_custom_call.1} parent=1 // pred_fallthru
      _
    // Predicated region
    $region42: #{tpu_custom_call.1} parent=1 // pred_check
      _
    $region43: #{tpu_custom_call.1} parent=1 // pred_check_branch
      %38 = sbr.rel (0) target = $region45
    $region44: #{tpu_custom_call.1} parent=1 // pred_region
      _
    $region45: #{tpu_custom_call.1} parent=1 // pred_fallthru
      _
    %v39 = vld [vmem:[%s0] sm:$0xff]
    %v40 = vld [vmem:[%s0 + $0x8] sm:$0xff]
    %v41 = vld [vmem:[%s1] sm:$0xff]
    %v42 = vld [vmem:[%s1 + $0x8] sm:$0xff]
    %v43 = vld [vmem:[%s1 + $0x10] sm:$0xff]
    %v44 = vld [vmem:[%s1 + $0x18] sm:$0xff]
    %v45 = vld [vmem:[%s2] sm:$0xff]
    %v46 = vld [vmem:[%s2 + $0x8] sm:$0xff]
    %v47 = vld [vmem:[%s2 + $0x10] sm:$0xff]
    %v48 = vld [vmem:[%s2 + $0x18] sm:$0xff]
    %50 = vset.pattern.permute.xlu0 0
    %51 = vperm.xlu0 %50, %v45
    %v52 = vpop.permute.xlu0 %51
    %55 = vset.pattern.permute.xlu0 0
    %56 = vperm.xlu0 %55, %v46
    %v57 = vpop.permute.xlu0 %56
    %60 = vset.pattern.permute.xlu0 0
    %61 = vperm.xlu0 %60, %v47
    %v62 = vpop.permute.xlu0 %61
    %65 = vset.pattern.permute.xlu0 0
    %66 = vperm.xlu0 %65, %v48
    %v67 = vpop.permute.xlu0 %66
    %vm69 = vcmask 130048
    %v71 = vsel %vm69, %v41, 0
    %v74 = vsel %vm69, %v42, 0
    %v77 = vsel %vm69, %v43, 0
    %v80 = vsel %vm69, %v44, 0
    %82 = vmatpush.msra.mxu0 0.0
    %83 = vmatpush.msra.mxu0 0.0
    %84 = vmatpush.msra.mxu0 0.0
    %85 = vmatpush.msra.mxu0 0.0
    %86 = vmatpush.msra.mxu0 0.0
    %87 = vmatpush.msra.mxu0 0.0
    %88 = vmatpush.msra.mxu0 0.0
    %89 = vmatpush.msra.mxu0 0.0
    %90 = vmatpush.msra.mxu0 0.0
    %91 = vmatpush.msra.mxu0 0.0
    %92 = vmatpush.msra.mxu0 0.0
    %93 = vmatpush.msra.mxu0 0.0
    %94 = vmatpush.msra.mxu0 0.0
    %95 = vmatpush.msra.mxu0 0.0
    %96 = vmatpush.msra.mxu0 %v40
    %97 = vmatpush.msra.mxu0 %v39
    %98 = vmatmul.f32.gmra.mxu0 %v71
    %v99 = vpop.f32.mrf.mxu0
    %v100 = vadd.f32 %v52, %v99
    %101 = vmatmul.f32.gmra.mxu0 %v74
    %v102 = vpop.f32.mrf.mxu0
    %v103 = vadd.f32 %v57, %v102
    %104 = vmatmul.f32.gmra.mxu0 %v77
    %v105 = vpop.f32.mrf.mxu0
    %v106 = vadd.f32 %v62, %v105
    %107 = vmatmul.f32.gmra.mxu0 %v80
    %v108 = vpop.f32.mrf.mxu0
    %v109 = vadd.f32 %v67, %v108
    %110 = vdwg.mxu0
    %v111 = vtanh.pop %v100
    %v112 = vtanh.pop %v103
    %v113 = vtanh.pop %v106
    %v114 = vtanh.pop %v109
    %v115 = vld [vmem:[%s3] sm:$0xff]
    %v116 = vld [vmem:[%s3 + $0x8] sm:$0xff]
    %v117 = vld [vmem:[%s3 + $0x10] sm:$0xff]
    %v118 = vld [vmem:[%s3 + $0x18] sm:$0xff]
    %v119 = vld [vmem:[%s4] sm:$0xff]
    %v120 = vld [vmem:[%s4 + $0x8] sm:$0xff]
    %v121 = vld [vmem:[%s4 + $0x10] sm:$0xff]
    %v122 = vld [vmem:[%s4 + $0x18] sm:$0xff]
    %v123 = vadd.f32 %v111, %v112
    %v124 = vadd.f32 %v123, %v113
    %v125 = vadd.f32 %v124, %v114
    %v126 = vrot.slane %v125, 4
    %v127 = vadd.f32 %v125, %v126
    %v128 = vrot.slane %v127, 2
    %v129 = vadd.f32 %v127, %v128
    %v130 = vrot.slane %v129, 1
    %v131 = vadd.f32 %v129, %v130
    %v132 = vrcp.pop 32.0
    %v133 = vmul.f32 32.0, %v132
    %v134 = vsub.f32 1.0, %v133
    %v135 = vmul.f32 %v132, %v134
    %v136 = vadd.f32 %v132, %v135
    %vm137 = vweird.f32 %v132
    %v138 = vsel %vm137, %v132, %v136
    %v139 = vmul.f32 %v131, %v138
    %v140 = vsub.f32 %v111, %v139
    %v141 = vsub.f32 %v112, %v139
    %v142 = vsub.f32 %v113, %v139
    %v143 = vsub.f32 %v114, %v139
    %v144 = vmul.f32 %v140, %v140
    %v145 = vmul.f32 %v141, %v141
    %v146 = vmul.f32 %v142, %v142
    %v147 = vmul.f32 %v143, %v143
    %v148 = vadd.f32 %v144, %v145
    %v149 = vadd.f32 %v148, %v146
    %v150 = vadd.f32 %v149, %v147
    %v151 = vrot.slane %v150, 4
    %v152 = vadd.f32 %v150, %v151
    %v153 = vrot.slane %v152, 2
    %v154 = vadd.f32 %v152, %v153
    %v155 = vrot.slane %v154, 1
    %v156 = vadd.f32 %v154, %v155
    %v157 = vmul.f32 %v156, %v138
    %v158 = vadd.f32 %v157, 1e-05
    %v159 = vrsqrt.pop %v158
    %v160 = vmul.f32 %v159, %v158
    %v161 = vmul.f32 %v160, %v159
    %v162 = vmul.f32 0.5, %v161
    %v163 = vsub.f32 1.5, %v162
    %v164 = vmul.f32 %v159, %v163
    %vm165 = vweird.f32 %v158
    %vm166 = vweird.f32 %v159
    %vm167 = vmor %vm165, %vm166
    %v168 = vsel %vm167, %v159, %v164
    %v169 = vmul.f32 %v140, %v168
    %v170 = vmul.f32 %v141, %v168
    %v171 = vmul.f32 %v142, %v168
    %v172 = vmul.f32 %v143, %v168
    %174 = vset.pattern.permute.xlu0 0
    %175 = vperm.xlu0 %174, %v115
    %v176 = vpop.permute.xlu0 %175
    %179 = vset.pattern.permute.xlu0 0
    %180 = vperm.xlu0 %179, %v116
    %v181 = vpop.permute.xlu0 %180
    %184 = vset.pattern.permute.xlu0 0
    %185 = vperm.xlu0 %184, %v117
    %v186 = vpop.permute.xlu0 %185
    %189 = vset.pattern.permute.xlu0 0
    %190 = vperm.xlu0 %189, %v118
    %v191 = vpop.permute.xlu0 %190
    %v193 = vmul.f32 %v169, %v176
    %v194 = vmul.f32 %v170, %v181
    %v195 = vmul.f32 %v171, %v186
    %v196 = vmul.f32 %v172, %v191
    %198 = vset.pattern.permute.xlu0 0
    %199 = vperm.xlu0 %198, %v119
    %v200 = vpop.permute.xlu0 %199
    %203 = vset.pattern.permute.xlu0 0
    %204 = vperm.xlu0 %203, %v120
    %v205 = vpop.permute.xlu0 %204
    %208 = vset.pattern.permute.xlu0 0
    %209 = vperm.xlu0 %208, %v121
    %v210 = vpop.permute.xlu0 %209
    %213 = vset.pattern.permute.xlu0 0
    %214 = vperm.xlu0 %213, %v122
    %v215 = vpop.permute.xlu0 %214
    %v217 = vadd.f32 %v193, %v200
    %v218 = vadd.f32 %v194, %v205
    %v219 = vadd.f32 %v195, %v210
    %v220 = vadd.f32 %v196, %v215
    %v221 = vld [vmem:[%s5] sm:$0xff]
    %v222 = vld [vmem:[%s5 + $0x8] sm:$0xff]
    %v223 = vld [vmem:[%s5 + $0x10] sm:$0xff]
    %v224 = vld [vmem:[%s5 + $0x18] sm:$0xff]
    %v225 = vld [vmem:[%s6] sm:$0xff]
    %v226 = vld [vmem:[%s6 + $0x8] sm:$0xff]
    %v227 = vld [vmem:[%s6 + $0x10] sm:$0xff]
    %v228 = vld [vmem:[%s6 + $0x18] sm:$0xff]
    %230 = vset.pattern.permute.xlu0 0
    %231 = vperm.xlu0 %230, %v225
    %v232 = vpop.permute.xlu0 %231
    %235 = vset.pattern.permute.xlu0 0
    %236 = vperm.xlu0 %235, %v226
    %v237 = vpop.permute.xlu0 %236
    %240 = vset.pattern.permute.xlu0 0
    %241 = vperm.xlu0 %240, %v227
    %v242 = vpop.permute.xlu0 %241
    %245 = vset.pattern.permute.xlu0 0
    %246 = vperm.xlu0 %245, %v228
    %v247 = vpop.permute.xlu0 %246
    %vm249 = vcmask 261120
    %v251 = vsel %vm249, %v221, 0
    %v254 = vsel %vm249, %v222, 0
    %v257 = vsel %vm249, %v223, 0
    %v260 = vsel %vm249, %v224, 0
    %262 = vmatpush.msra.mxu0 0.0
    %263 = vmatpush.msra.mxu0 0.0
    %264 = vmatpush.msra.mxu0 0.0
    %265 = vmatpush.msra.mxu0 0.0
    %266 = vmatpush.msra.mxu0 0.0
    %267 = vmatpush.msra.mxu0 0.0
    %268 = vmatpush.msra.mxu0 0.0
    %269 = vmatpush.msra.mxu0 0.0
    %270 = vmatpush.msra.mxu0 0.0
    %271 = vmatpush.msra.mxu0 0.0
    %272 = vmatpush.msra.mxu0 0.0
    %273 = vmatpush.msra.mxu0 0.0
    %274 = vmatpush.msra.mxu0 %v220
    %275 = vmatpush.msra.mxu0 %v219
    %276 = vmatpush.msra.mxu0 %v218
    %277 = vmatpush.msra.mxu0 %v217
    %278 = vmatmul.f32.gmra.mxu0 %v251
    %v279 = vpop.f32.mrf.mxu0
    %v280 = vadd.f32 %v232, %v279
    %281 = vmatmul.f32.gmra.mxu0 %v254
    %v282 = vpop.f32.mrf.mxu0
    %v283 = vadd.f32 %v237, %v282
    %284 = vmatmul.f32.gmra.mxu0 %v257
    %v285 = vpop.f32.mrf.mxu0
    %v286 = vadd.f32 %v242, %v285
    %287 = vmatmul.f32.gmra.mxu0 %v260
    %v288 = vpop.f32.mrf.mxu0
    %v289 = vadd.f32 %v247, %v288
    %290 = vdwg.mxu0
    %v291 = vtanh.pop %v280
    %v292 = vtanh.pop %v283
    %v293 = vtanh.pop %v286
    %v294 = vtanh.pop %v289
    %v295 = vld [vmem:[%s7] sm:$0xff]
    %v296 = vld [vmem:[%s7 + $0x8] sm:$0xff]
    %v297 = vld [vmem:[%s7 + $0x10] sm:$0xff]
    %v298 = vld [vmem:[%s7 + $0x18] sm:$0xff]
    %v299 = vld [vmem:[%s8] sm:$0xff]
    %v300 = vld [vmem:[%s8 + $0x8] sm:$0xff]
    %v301 = vld [vmem:[%s8 + $0x10] sm:$0xff]
    %v302 = vld [vmem:[%s8 + $0x18] sm:$0xff]
    %v303 = vadd.f32 %v291, %v292
    %v304 = vadd.f32 %v303, %v293
    %v305 = vadd.f32 %v304, %v294
    %v306 = vrot.slane %v305, 4
    %v307 = vadd.f32 %v305, %v306
    %v308 = vrot.slane %v307, 2
    %v309 = vadd.f32 %v307, %v308
    %v310 = vrot.slane %v309, 1
    %v311 = vadd.f32 %v309, %v310
    %v312 = vmul.f32 %v311, %v138
    %v313 = vsub.f32 %v291, %v312
    %v314 = vsub.f32 %v292, %v312
    %v315 = vsub.f32 %v293, %v312
    %v316 = vsub.f32 %v294, %v312
    %v317 = vmul.f32 %v313, %v313
    %v318 = vmul.f32 %v314, %v314
    %v319 = vmul.f32 %v315, %v315
    %v320 = vmul.f32 %v316, %v316
    %v321 = vadd.f32 %v317, %v318
    %v322 = vadd.f32 %v321, %v319
    %v323 = vadd.f32 %v322, %v320
    %v324 = vrot.slane %v323, 4
    %v325 = vadd.f32 %v323, %v324
    %v326 = vrot.slane %v325, 2
    %v327 = vadd.f32 %v325, %v326
    %v328 = vrot.slane %v327, 1
    %v329 = vadd.f32 %v327, %v328
    %v330 = vmul.f32 %v329, %v138
    %v331 = vadd.f32 %v330, 1e-05
    %v332 = vrsqrt.pop %v331
    %v333 = vmul.f32 %v332, %v331
    %v334 = vmul.f32 %v333, %v332
    %v335 = vmul.f32 0.5, %v334
    %v336 = vsub.f32 1.5, %v335
    %v337 = vmul.f32 %v332, %v336
    %vm338 = vweird.f32 %v331
    %vm339 = vweird.f32 %v332
    %vm340 = vmor %vm338, %vm339
    %v341 = vsel %vm340, %v332, %v337
    %v342 = vmul.f32 %v313, %v341
    %v343 = vmul.f32 %v314, %v341
    %v344 = vmul.f32 %v315, %v341
    %v345 = vmul.f32 %v316, %v341
    %347 = vset.pattern.permute.xlu0 0
    %348 = vperm.xlu0 %347, %v295
    %v349 = vpop.permute.xlu0 %348
    %352 = vset.pattern.permute.xlu0 0
    %353 = vperm.xlu0 %352, %v296
    %v354 = vpop.permute.xlu0 %353
    %357 = vset.pattern.permute.xlu0 0
    %358 = vperm.xlu0 %357, %v297
    %v359 = vpop.permute.xlu0 %358
    %362 = vset.pattern.permute.xlu0 0
    %363 = vperm.xlu0 %362, %v298
    %v364 = vpop.permute.xlu0 %363
    %v366 = vmul.f32 %v342, %v349
    %v367 = vmul.f32 %v343, %v354
    %v368 = vmul.f32 %v344, %v359
    %v369 = vmul.f32 %v345, %v364
    %371 = vset.pattern.permute.xlu0 0
    %372 = vperm.xlu0 %371, %v299
    %v373 = vpop.permute.xlu0 %372
    %376 = vset.pattern.permute.xlu0 0
    %377 = vperm.xlu0 %376, %v300
    %v378 = vpop.permute.xlu0 %377
    %381 = vset.pattern.permute.xlu0 0
    %382 = vperm.xlu0 %381, %v301
    %v383 = vpop.permute.xlu0 %382
    %386 = vset.pattern.permute.xlu0 0
    %387 = vperm.xlu0 %386, %v302
    %v388 = vpop.permute.xlu0 %387
    %v390 = vadd.f32 %v366, %v373
    %v391 = vadd.f32 %v367, %v378
    %v392 = vadd.f32 %v368, %v383
    %v393 = vadd.f32 %v369, %v388
    %s394 = scalar_lea.vmem %s5, 32
    %v395 = vld [vmem:[%s394] sm:$0xff]
    %v396 = vld [vmem:[%s394 + $0x8] sm:$0xff]
    %v397 = vld [vmem:[%s394 + $0x10] sm:$0xff]
    %v398 = vld [vmem:[%s394 + $0x18] sm:$0xff]
    %s399 = scalar_lea.vmem %s6, 32
    %v400 = vld [vmem:[%s399] sm:$0xff]
    %v401 = vld [vmem:[%s399 + $0x8] sm:$0xff]
    %v402 = vld [vmem:[%s399 + $0x10] sm:$0xff]
    %v403 = vld [vmem:[%s399 + $0x18] sm:$0xff]
    %405 = vset.pattern.permute.xlu0 0
    %406 = vperm.xlu0 %405, %v400
    %v407 = vpop.permute.xlu0 %406
    %410 = vset.pattern.permute.xlu0 0
    %411 = vperm.xlu0 %410, %v401
    %v412 = vpop.permute.xlu0 %411
    %415 = vset.pattern.permute.xlu0 0
    %416 = vperm.xlu0 %415, %v402
    %v417 = vpop.permute.xlu0 %416
    %420 = vset.pattern.permute.xlu0 0
    %421 = vperm.xlu0 %420, %v403
    %v422 = vpop.permute.xlu0 %421
    %v425 = vsel %vm249, %v395, 0
    %v428 = vsel %vm249, %v396, 0
    %v431 = vsel %vm249, %v397, 0
    %v434 = vsel %vm249, %v398, 0
    %436 = vmatpush.msra.mxu0 0.0
    %437 = vmatpush.msra.mxu0 0.0
    %438 = vmatpush.msra.mxu0 0.0
    %439 = vmatpush.msra.mxu0 0.0
    %440 = vmatpush.msra.mxu0 0.0
    %441 = vmatpush.msra.mxu0 0.0
    %442 = vmatpush.msra.mxu0 0.0
    %443 = vmatpush.msra.mxu0 0.0
    %444 = vmatpush.msra.mxu0 0.0
    %445 = vmatpush.msra.mxu0 0.0
    %446 = vmatpush.msra.mxu0 0.0
    %447 = vmatpush.msra.mxu0 0.0
    %448 = vmatpush.msra.mxu0 %v393
    %449 = vmatpush.msra.mxu0 %v392
    %450 = vmatpush.msra.mxu0 %v391
    %451 = vmatpush.msra.mxu0 %v390
    %452 = vmatmul.f32.gmra.mxu0 %v425
    %v453 = vpop.f32.mrf.mxu0
    %v454 = vadd.f32 %v407, %v453
    %455 = vmatmul.f32.gmra.mxu0 %v428
    %v456 = vpop.f32.mrf.mxu0
    %v457 = vadd.f32 %v412, %v456
    %458 = vmatmul.f32.gmra.mxu0 %v431
    %v459 = vpop.f32.mrf.mxu0
    %v460 = vadd.f32 %v417, %v459
    %461 = vmatmul.f32.gmra.mxu0 %v434
    %v462 = vpop.f32.mrf.mxu0
    %v463 = vadd.f32 %v422, %v462
    %464 = vdwg.mxu0
    %v465 = vtanh.pop %v454
    %v466 = vtanh.pop %v457
    %v467 = vtanh.pop %v460
    %v468 = vtanh.pop %v463
    %s469 = scalar_lea.vmem %s7, 32
    %v470 = vld [vmem:[%s469] sm:$0xff]
    %v471 = vld [vmem:[%s469 + $0x8] sm:$0xff]
    %v472 = vld [vmem:[%s469 + $0x10] sm:$0xff]
    %v473 = vld [vmem:[%s469 + $0x18] sm:$0xff]
    %s474 = scalar_lea.vmem %s8, 32
    %v475 = vld [vmem:[%s474] sm:$0xff]
    %v476 = vld [vmem:[%s474 + $0x8] sm:$0xff]
    %v477 = vld [vmem:[%s474 + $0x10] sm:$0xff]
    %v478 = vld [vmem:[%s474 + $0x18] sm:$0xff]
    %v479 = vadd.f32 %v465, %v466
    %v480 = vadd.f32 %v479, %v467
    %v481 = vadd.f32 %v480, %v468
    %v482 = vrot.slane %v481, 4
    %v483 = vadd.f32 %v481, %v482
    %v484 = vrot.slane %v483, 2
    %v485 = vadd.f32 %v483, %v484
    %v486 = vrot.slane %v485, 1
    %v487 = vadd.f32 %v485, %v486
    %v488 = vmul.f32 %v487, %v138
    %v489 = vsub.f32 %v465, %v488
    %v490 = vsub.f32 %v466, %v488
    %v491 = vsub.f32 %v467, %v488
    %v492 = vsub.f32 %v468, %v488
    %v493 = vmul.f32 %v489, %v489
    %v494 = vmul.f32 %v490, %v490
    %v495 = vmul.f32 %v491, %v491
    %v496 = vmul.f32 %v492, %v492
    %v497 = vadd.f32 %v493, %v494
    %v498 = vadd.f32 %v497, %v495
    %v499 = vadd.f32 %v498, %v496
    %v500 = vrot.slane %v499, 4
    %v501 = vadd.f32 %v499, %v500
    %v502 = vrot.slane %v501, 2
    %v503 = vadd.f32 %v501, %v502
    %v504 = vrot.slane %v503, 1
    %v505 = vadd.f32 %v503, %v504
    %v506 = vmul.f32 %v505, %v138
    %v507 = vadd.f32 %v506, 1e-05
    %v508 = vrsqrt.pop %v507
    %v509 = vmul.f32 %v508, %v507
    %v510 = vmul.f32 %v509, %v508
    %v511 = vmul.f32 0.5, %v510
    %v512 = vsub.f32 1.5, %v511
    %v513 = vmul.f32 %v508, %v512
    %vm514 = vweird.f32 %v507
    %vm515 = vweird.f32 %v508
    %vm516 = vmor %vm514, %vm515
    %v517 = vsel %vm516, %v508, %v513
    %v518 = vmul.f32 %v489, %v517
    %v519 = vmul.f32 %v490, %v517
    %v520 = vmul.f32 %v491, %v517
    %v521 = vmul.f32 %v492, %v517
    %523 = vset.pattern.permute.xlu0 0
    %524 = vperm.xlu0 %523, %v470
    %v525 = vpop.permute.xlu0 %524
    %528 = vset.pattern.permute.xlu0 0
    %529 = vperm.xlu0 %528, %v471
    %v530 = vpop.permute.xlu0 %529
    %533 = vset.pattern.permute.xlu0 0
    %534 = vperm.xlu0 %533, %v472
    %v535 = vpop.permute.xlu0 %534
    %538 = vset.pattern.permute.xlu0 0
    %539 = vperm.xlu0 %538, %v473
    %v540 = vpop.permute.xlu0 %539
    %v542 = vmul.f32 %v518, %v525
    %v543 = vmul.f32 %v519, %v530
    %v544 = vmul.f32 %v520, %v535
    %v545 = vmul.f32 %v521, %v540
    %547 = vset.pattern.permute.xlu0 0
    %548 = vperm.xlu0 %547, %v475
    %v549 = vpop.permute.xlu0 %548
    %552 = vset.pattern.permute.xlu0 0
    %553 = vperm.xlu0 %552, %v476
    %v554 = vpop.permute.xlu0 %553
    %557 = vset.pattern.permute.xlu0 0
    %558 = vperm.xlu0 %557, %v477
    %v559 = vpop.permute.xlu0 %558
    %562 = vset.pattern.permute.xlu0 0
    %563 = vperm.xlu0 %562, %v478
    %v564 = vpop.permute.xlu0 %563
    %v566 = vadd.f32 %v542, %v549
    %v567 = vadd.f32 %v543, %v554
    %v568 = vadd.f32 %v544, %v559
    %v569 = vadd.f32 %v545, %v564
    %v570 = vld [vmem:[%s9] sm:$0xff]
    %v571 = vld [vmem:[%s10] sm:$0xff]
    %573 = vset.pattern.permute.xlu0 0
    %574 = vperm.xlu0 %573, %v571
    %v575 = vpop.permute.xlu0 %574
    %v578 = vsel %vm249, %v570, 0
    %580 = vmatpush.msra.mxu0 0.0
    %581 = vmatpush.msra.mxu0 0.0
    %582 = vmatpush.msra.mxu0 0.0
    %583 = vmatpush.msra.mxu0 0.0
    %584 = vmatpush.msra.mxu0 0.0
    %585 = vmatpush.msra.mxu0 0.0
    %586 = vmatpush.msra.mxu0 0.0
    %587 = vmatpush.msra.mxu0 0.0
    %588 = vmatpush.msra.mxu0 0.0
    %589 = vmatpush.msra.mxu0 0.0
    %590 = vmatpush.msra.mxu0 0.0
    %591 = vmatpush.msra.mxu0 0.0
    %592 = vmatpush.msra.mxu0 %v569
    %593 = vmatpush.msra.mxu0 %v568
    %594 = vmatpush.msra.mxu0 %v567
    %595 = vmatpush.msra.mxu0 %v566
    %596 = vmatmul.f32.gmra.mxu0 %v578
    %v597 = vpop.f32.mrf.mxu0
    %v598 = vadd.f32 %v575, %v597
    %599 = vdwg.mxu0
    %600 = vst [vmem:[#allocation2] sm:$0xff] %v598
    // Predicated region
    $region46: #{tpu_custom_call.1} parent=1 // pred_check
      _
    $region47: #{tpu_custom_call.1} parent=1 // pred_check_branch
      %602 = sbr.rel (0) target = $region49
    $region48: #{tpu_custom_call.1} parent=1 // pred_region
      %604 = vsyncadd [#allocation3], 0
      %s606 = sshll.u32 [#allocation2], 4
      %s607 = int_to_ptr.vmem [resolvable:$true] %s606
      %s608 = sshll.u32 %s11, 4
      %s609 = int_to_ptr.hbm [resolvable:$true] %s608
      %611 = dma.vmem_to_hbm [thread:$0]  %s607, 128, %s609, [#allocation3]
    $region49: #{tpu_custom_call.1} parent=1 // pred_fallthru
      _
    // Predicated region
    $region50: #{tpu_custom_call.1} parent=1 // pred_check
      _
    $region51: #{tpu_custom_call.1} parent=1 // pred_check_branch
      %613 = sbr.rel (0) target = $region53
    $region52: #{tpu_custom_call.1} parent=1 // pred_region
      %615 = dma.done [#allocation3], 128
    $region53: #{tpu_custom_call.1} parent=1 // pred_fallthru
      _
    %616 = vsyncpa [#allocation3], 1

</llo_original>
